<compile_context>
chip_gen: v5e
topology: v5e:2x2
jax: 0.10.0
libtpu: 0.0.40
codegen_flags: <defaults>
</compile_context>

<pallas_src>
import jax
import jax.numpy as jnp
from jax.experimental import pallas as pl
from jax.experimental.pallas import tpu as pltpu


def sab_kernel(x_ref, w_ref, b_ref, o_ref):
    """One (batch, spatial-tile) block.

    x_ref: (1, C, TS) VMEM   channel-major activation tile (native dtype)
    w_ref: (C, 1)     VMEM   conv1x1 weight
    b_ref: (1,)       SMEM   conv1x1 bias (scalar)
    o_ref: (1, C, TS) VMEM   gated output tile
    """
    # Gate reduce in f32 (VPU multiply + small sublane reduce over C).
    x_f32 = x_ref[0].astype(jnp.float32)                       # (C, TS)
    w_f32 = w_ref[...].astype(jnp.float32)                     # (C, 1)
    gate = jnp.sum(x_f32 * w_f32, axis=0, keepdims=True) + b_ref[0]   # (1, TS)
    gate = jax.nn.sigmoid(gate)

    # Output multiply in the native dtype: re-read x_ref instead of keeping the
    # f32-upcast tile live (bf16 VALU on v6e/v7x; less VMEM temp footprint).
    o_ref[0] = x_ref[0] * gate.astype(o_ref.dtype)             # broadcast over C


def _round_up(x, m):
    return ((x + m - 1) // m) * m


def spatial_attention_block(x, w, b, *, target_block_bytes=3 * 1024 * 1024):
    """x: (N, C, H, W) NCHW; w: (C,) conv1x1 weight; b: () bias -> (N, C, H, W)."""
    N, C, H, W = x.shape
    S = H * W
    itemsize = jnp.dtype(x.dtype).itemsize

    # Padded channel count: sub-tile C occupies full (8,128)/(16,128)/(32,128)
    # vreg tiles in VMEM, so budget against the padded footprint.
    c_pad = _round_up(C, max(8, 32 // itemsize))

    # Byte-based, lane-dense spatial tile (multiple of 128).
    ts = max(128, (target_block_bytes // (c_pad * itemsize)) // 128 * 128)
    s128 = _round_up(S, 128)
    ts = min(ts, s128)
    # v7x: with N == 1, force >= 2 spatial blocks so both TensorCores get work.
    if N == 1 and s128 >= 256:
        ts = min(ts, max(128, ((s128 // 2) // 128) * 128))

    # Pad the spatial axis to a multiple of the tile (never a full-S fallback).
    s_pad = _round_up(S, ts)
    grid_s = s_pad // ts

    # NCHW is already channel-major: this reshape is layout-free.
    x_flat = x.reshape(N, C, S)
    if s_pad != S:
        x_flat = jnp.pad(x_flat, ((0, 0), (0, 0), (0, s_pad - S)))
    w2 = w.reshape(C, 1).astype(jnp.float32)
    b1 = jnp.asarray(b, jnp.float32).reshape(1)

    # Deeper buffering only when blocks are unavoidably tiny.
    blk_vmem_bytes = c_pad * ts * itemsize
    pipeline_mode = (
        pl.Buffered(3) if (blk_vmem_bytes < (512 << 10) and grid_s >= 3) else None
    )

    x_spec = pl.BlockSpec((1, C, ts), lambda n, s: (n, 0, s),
                          pipeline_mode=pipeline_mode)
    o_spec = pl.BlockSpec((1, C, ts), lambda n, s: (n, 0, s),
                          pipeline_mode=pipeline_mode)

    cost = pl.CostEstimate(
        flops=3 * N * C * S,               # reduce mul+add, output mul
        transcendentals=N * S,             # sigmoid
        bytes_accessed=2 * N * C * S * itemsize,
    )

    out_flat = pl.pallas_call(
        sab_kernel,
        out_shape=jax.ShapeDtypeStruct((N, C, s_pad), x.dtype),
        grid=(N, grid_s),
        in_specs=[
            x_spec,
            pl.BlockSpec((C, 1), lambda n, s: (0, 0)),
            pl.BlockSpec(memory_space=pltpu.MemorySpace.SMEM),
        ],
        out_specs=o_spec,
        compiler_params=pltpu.CompilerParams(
            dimension_semantics=("parallel", "parallel"),
            vmem_limit_bytes=32 * 1024 * 1024,
        ),
        cost_estimate=cost,
    )(x_flat, w2, b1)

    if s_pad != S:
        out_flat = out_flat[:, :, :S]
    return out_flat.reshape(N, C, H, W)


def sab_ref(x, w, b):
    """Pure-JAX reference matching the PyTorch forward (NCHW)."""
    gate = jax.nn.sigmoid(jnp.einsum("nchw,c->nhw", x, w) + b)
    return x * gate[:, None, :, :]


if __name__ == "__main__":
    key = jax.random.PRNGKey(0)
    k1, k2, k3 = jax.random.split(key, 3)

    N, C, H, W = 2, 4, 16, 16
    x = jax.random.normal(k1, (N, C, H, W), jnp.float32)
    w = 0.3 * jax.random.normal(k2, (C,), jnp.float32)      # conv1x1 weight (C->1)
    b = 0.1 * jax.random.normal(k3, (), jnp.float32)        # conv1x1 bias

    out = jax.block_until_ready(spatial_attention_block(x, w, b))
    ref = sab_ref(x, w, b)
    assert out.shape == ref.shape == (N, C, H, W)
    err = float(jnp.max(jnp.abs(out - ref)))
    assert jnp.allclose(out, ref, atol=1e-5, rtol=1e-5), f"max abs err {err}"
    print("KERNEL_OK")
</pallas_src>

<mosaic_0001>
module attributes {stable_mosaic.version = 11 : i64} {
  func.func @sab_kernel(%arg0: i32, %arg1: i32, %arg2: memref<1x4x256xf32, #tpu.memory_space<vmem>>, %arg3: memref<4x1xf32, #tpu.memory_space<vmem>>, %arg4: memref<1xf32, #tpu.memory_space<smem>>, %arg5: memref<1x4x256xf32, #tpu.memory_space<vmem>>) attributes {dimension_semantics = [#tpu.dimension_semantics<parallel>, #tpu.dimension_semantics<parallel>], iteration_bounds = array<i64: 2, 1>, scalar_prefetch = 0 : i64, scratch_operands = 0 : i64, tpu.core_type = #tpu.core_type<tc>, window_params = [{transform_indices = @transform_0, window_bounds = array<i64: 1, 4, 256>}, {pipeline_mode = #tpu.pipeline_mode<synchronous>, transform_indices = @transform_1, window_bounds = array<i64: 4, 1>}, {transform_indices = @transform_2, window_bounds = array<i64: 1>}, {transform_indices = @transform_3, window_bounds = array<i64: 1, 4, 256>}]} {
    %c0 = arith.constant 0 : index
    %c0_0 = arith.constant 0 : index
    %c0_1 = arith.constant 0 : index
    %0 = vector.load %arg2[%c0, %c0_0, %c0_1] : memref<1x4x256xf32, #tpu.memory_space<vmem>>, vector<1x4x256xf32>
    %1 = vector.shape_cast %0 : vector<1x4x256xf32> to vector<4x256xf32>
    %c0_2 = arith.constant 0 : index
    %c0_3 = arith.constant 0 : index
    %2 = vector.load %arg3[%c0_2, %c0_3] : memref<4x1xf32, #tpu.memory_space<vmem>>, vector<4x1xf32>
    %3 = vector.broadcast %2 : vector<4x1xf32> to vector<4x256xf32>
    %4 = arith.mulf %1, %3 : vector<4x256xf32>
    %cst = arith.constant dense<0.000000e+00> : vector<256xf32>
    %5 = vector.multi_reduction <add>, %4, %cst [0] : vector<4x256xf32> to vector<256xf32>
    %6 = vector.shape_cast %5 : vector<256xf32> to vector<1x256xf32>
    %c0_4 = arith.constant 0 : index
    %7 = memref.load %arg4[%c0_4] : memref<1xf32, #tpu.memory_space<smem>>
    %8 = vector.broadcast %7 : f32 to vector<1x256xf32>
    %9 = arith.addf %6, %8 : vector<1x256xf32>
    %10 = arith.negf %9 : vector<1x256xf32>
    %11 = math.exp %10 : vector<1x256xf32>
    %cst_5 = arith.constant 1.000000e+00 : f32
    %12 = vector.broadcast %cst_5 : f32 to vector<1x256xf32>
    %13 = arith.addf %12, %11 : vector<1x256xf32>
    %14 = arith.divf %12, %13 : vector<1x256xf32>
    %c0_6 = arith.constant 0 : index
    %c0_7 = arith.constant 0 : index
    %c0_8 = arith.constant 0 : index
    %15 = vector.load %arg2[%c0_6, %c0_7, %c0_8] : memref<1x4x256xf32, #tpu.memory_space<vmem>>, vector<1x4x256xf32>
    %16 = vector.shape_cast %15 : vector<1x4x256xf32> to vector<4x256xf32>
    %17 = vector.broadcast %14 : vector<1x256xf32> to vector<4x256xf32>
    %18 = arith.mulf %16, %17 : vector<4x256xf32>
    %c0_9 = arith.constant 0 : index
    %c0_10 = arith.constant 0 : index
    %c0_11 = arith.constant 0 : index
    %19 = vector.load %arg5[%c0_9, %c0_10, %c0_11] : memref<1x4x256xf32, #tpu.memory_space<vmem>>, vector<1x4x256xf32>
    %20 = vector.shape_cast %19 : vector<1x4x256xf32> to vector<4x256xf32>
    %21 = vector.shape_cast %18 : vector<4x256xf32> to vector<1x4x256xf32>
    tpu.vector_store %arg5[%c0_9, %c0_10, %c0_11], %21 {strides = array<i32>} : memref<1x4x256xf32, #tpu.memory_space<vmem>>, vector<1x4x256xf32>,
    return
  }
  func.func @transform_0(%arg0: i32, %arg1: i32) -> (i32, i32, i32) {
    %c0_i32 = arith.constant 0 : i32
    %c0_i32_0 = arith.constant 0 : i32
    return %arg0, %c0_i32, %arg1 : i32, i32, i32
  }
  func.func @transform_1(%arg0: i32, %arg1: i32) -> (i32, i32) {
    %c0_i32 = arith.constant 0 : i32
    %c0_i32_0 = arith.constant 0 : i32
    %c0_i32_1 = arith.constant 0 : i32
    return %c0_i32, %c0_i32_0 : i32, i32
  }
  func.func @transform_2(%arg0: i32, %arg1: i32) -> i32 {
    %c0_i32 = arith.constant 0 : i32
    %c0_i32_0 = arith.constant 0 : i32
    return %c0_i32 : i32
  }
  func.func @transform_3(%arg0: i32, %arg1: i32) -> (i32, i32, i32) {
    %c0_i32 = arith.constant 0 : i32
    %c0_i32_0 = arith.constant 0 : i32
    return %arg0, %c0_i32, %arg1 : i32, i32, i32
  }
}

</mosaic_0001>

<llo_original>
// kernel: tpu_custom_call.1
$region0: #{tpu_custom_call.1}
  #allocation0 [shape = 'u32[]', space=smem, size = 0x4, offset = 0x4, fixed_abs, tag = 'smem constant byte address 0x4 - core index']
  #allocation1 [shape = 'u32[72,128]{1,0:T(1,128)}', space=vmem, size = 0x9000, scoped, tag = 'internal scratch']
  #allocation2 [shape = 'f32[1]{0:T(128)S(6)}', space=smem, size = 0x200, scoped, tag = 'scoped memory for tpu_custom_call.1']
  %s0 = inlined_call_operand.hbm [shape: f32[2,4,256], index: 0, kind: input, shape index: {}]
  %s1 = inlined_call_operand.vmem [shape: f32[4,1], index: 1, kind: input, shape index: {}]
  %s2 = inlined_call_operand.<no memory space> [shape: f32[1], index: 2, kind: input, shape index: {}]
  %s3 = inlined_call_operand.hbm [shape: f32[2,4,256], index: 3, kind: output, shape index: {}]
  %s4 = sld [smem:[#allocation0]]
  $region49: #{tpu_custom_call.1} parent=0
    _
  %s6 = ssub.s32 1, %s4
  %s7 = scalar_select 0, %s6, %s4
  %8 = sst [smem:[#allocation2]] %s2
  $region1: #{tpu_custom_call.1} parent=0
    #allocation3 [shape = 'u8[8192]{0}', space=vmem, size = 0x2000, scoped, tag = 'input window, operand 0']
    #allocation4 [shape = 's32[2]{0}', space=sflag, size = 0x8, scoped, tag = 'scoped memory for tpu_custom_call.1']
    #allocation5 [shape = 's32[2]{0}', space=sflag, size = 0x8, scoped, tag = 'scoped memory for tpu_custom_call.1']
    #allocation6 [shape = 'u8[8192]{0}', space=vmem, size = 0x2000, scoped, tag = 'output window, operand 0']
    %9 = vsyncpa [#allocation4], 0
    %s10 = scalar_lea.sflag [#allocation4], 1
    %11 = vsyncpa %s10, 0
    %12 = vsyncpa [#allocation5], 0
    %s13 = scalar_lea.sflag [#allocation5], 1
    %14 = vsyncpa %s13, 0
    loop: start=0, step=1, limit=4
    $region2: #{tpu_custom_call.1} parent=1 // loop_pre_header
      _
    $region3: #{tpu_custom_call.1} parent=1 // loop_header
      %s16 = sphi 0, %s20
      %p17 = scmp.ge.s32.totalorder %s16, 4
      %s23 = sphi 0, %s35
      %s24 = sphi 0, %s31
      %s25 = sphi 0, %s23
      %s26 = sphi 0, %s24
      %s27 = sphi 0, %s25
      %s28 = sphi 0, %s26
      %s40 = sphi 0, %s42
      %s43 = sphi 0, %s40
      %s44 = sphi 0, %s43
      %s60 = sphi 0, %s44
      %s64 = sphi 0, %s64
      %s66 = sphi 0, %s64
      %s67 = sphi 0, %s66
      %s81 = sphi 0, %s67
      %s85 = sphi 0, %s85
      %s87 = sphi 0, %s85
      %s88 = sphi 0, %s87
      %s102 = sphi 0, %s88
      %s110 = sphi 0, %s112
      %s113 = sphi 0, %s110
      %s114 = sphi 0, %s113
      %s130 = sphi 0, %s114
    $region4: #{tpu_custom_call.1} parent=1 // loop_header_branch
      %19 = sbr.rel (%p17) target = $region8
    $region5: #{tpu_custom_call.1} parent=1 // loop_body
      %s21 = ssub.s32 %s16, 1
      %s22 = ssub.s32 %s16, 2
      %s29 = sadd.s32 1, %s24
      %p30 = scmp.ge.s32.totalorder %s29, 1
      %s31 = scalar_select %p30, 0, %s29
      %s32 = sadd.s32 1, %s23
      %s33 = scalar_select %p30, %s32, %s23
      %p34 = scmp.ge.s32.totalorder %s33, 2
      %s35 = scalar_select %p34, 0, %s33
      %s36 = ssub.s32 %s23, %s35
      %s37 = ssub.s32 %s24, %s31
      %s38 = sor.u32 %s36, %s37
      %p39 = scmp.eq.s32.totalorder %s38, 0
      %s41 = sadd.s32 %s40, 1
      %s42 = scalar_select %p39, %s40, %s41
      %p45 = pneg %p39
      %p46 = scmp.eq.s32.totalorder %s16, 1
      %p47 = por %p45, %p46
      %p48 = scmp.ne.s32.totalorder %s40, %s43
      %p49 = scmp.eq.s32.totalorder %s16, 0
      %p50 = por %p48, %p49
      %p51 = scmp.ne.s32.totalorder %s40, %s43
      %p52 = scmp.eq.s32.totalorder %s21, 1
      %p53 = por %p51, %p52
      %p54 = scmp.ne.s32.totalorder %s43, %s44
      %p55 = scmp.eq.s32.totalorder %s21, 0
      %p56 = por %p54, %p55
      %p57 = scmp.ne.s32.totalorder %s43, %s44
      %p58 = scmp.eq.s32.totalorder %s22, 1
      %p59 = por %p57, %p58
      %p61 = scmp.ne.s32.totalorder %s44, %s60
      %p62 = scmp.eq.s32.totalorder %s22, 0
      %p63 = por %p61, %p62
      %s65 = sadd.s32 %s64, 1
      %p68 = scmp.eq.s32.totalorder %s16, 1
      %p69 = scmp.ne.s32.totalorder %s64, %s66
      %p70 = scmp.eq.s32.totalorder %s16, 0
      %p71 = por %p69, %p70
      %p72 = scmp.ne.s32.totalorder %s64, %s66
      %p73 = scmp.eq.s32.totalorder %s21, 1
      %p74 = por %p72, %p73
      %p75 = scmp.ne.s32.totalorder %s66, %s67
      %p76 = scmp.eq.s32.totalorder %s21, 0
      %p77 = por %p75, %p76
      %p78 = scmp.ne.s32.totalorder %s66, %s67
      %p79 = scmp.eq.s32.totalorder %s22, 1
      %p80 = por %p78, %p79
      %p82 = scmp.ne.s32.totalorder %s67, %s81
      %p83 = scmp.eq.s32.totalorder %s22, 0
      %p84 = por %p82, %p83
      %s86 = sadd.s32 %s85, 1
      %p89 = scmp.eq.s32.totalorder %s16, 1
      %p90 = scmp.ne.s32.totalorder %s85, %s87
      %p91 = scmp.eq.s32.totalorder %s16, 0
      %p92 = por %p90, %p91
      %p93 = scmp.ne.s32.totalorder %s85, %s87
      %p94 = scmp.eq.s32.totalorder %s21, 1
      %p95 = por %p93, %p94
      %p96 = scmp.ne.s32.totalorder %s87, %s88
      %p97 = scmp.eq.s32.totalorder %s21, 0
      %p98 = por %p96, %p97
      %p99 = scmp.ne.s32.totalorder %s87, %s88
      %p100 = scmp.eq.s32.totalorder %s22, 1
      %p101 = por %p99, %p100
      %p103 = scmp.ne.s32.totalorder %s88, %s102
      %p104 = scmp.eq.s32.totalorder %s22, 0
      %p105 = por %p103, %p104
      %s106 = ssub.s32 %s23, %s35
      %s107 = ssub.s32 %s24, %s31
      %s108 = sor.u32 %s106, %s107
      %p109 = scmp.eq.s32.totalorder %s108, 0
      %s111 = sadd.s32 %s110, 1
      %s112 = scalar_select %p109, %s110, %s111
      %p115 = pneg %p109
      %p116 = scmp.eq.s32.totalorder %s16, 1
      %p117 = por %p115, %p116
      %p118 = scmp.ne.s32.totalorder %s110, %s113
      %p119 = scmp.eq.s32.totalorder %s16, 0
      %p120 = por %p118, %p119
      %p121 = scmp.ne.s32.totalorder %s110, %s113
      %p122 = scmp.eq.s32.totalorder %s21, 1
      %p123 = por %p121, %p122
      %p124 = scmp.ne.s32.totalorder %s113, %s114
      %p125 = scmp.eq.s32.totalorder %s21, 0
      %p126 = por %p124, %p125
      %p127 = scmp.ne.s32.totalorder %s113, %s114
      %p128 = scmp.eq.s32.totalorder %s22, 1
      %p129 = por %p127, %p128
      %p131 = scmp.ne.s32.totalorder %s114, %s130
      %p132 = scmp.eq.s32.totalorder %s22, 0
      %p133 = por %p131, %p132
      %p134 = scmp.le.s32.totalorder 1, %s16
      %p135 = scmp.lt.s32.totalorder %s16, 3
      %p136 = pnand %p134, %p135
      %p137 = pneg %p136
      // Predicated region
      $region9: #{tpu_custom_call.1} parent=5 // pred_check
        _
      $region10: #{tpu_custom_call.1} parent=5 // pred_check_branch
        %139 = sbr.rel (%p136) target = $region12
      $region11: #{tpu_custom_call.1} parent=5 // pred_region
        %s140 = ssub.s32 %s16, 1
        // Predicated region
        $region13: #{tpu_custom_call.1} parent=11 // pred_check
          %p141 = pneg %p77
        $region14: #{tpu_custom_call.1} parent=11 // pred_check_branch
          %143 = sbr.rel (%p141) target = $region16
        $region15: #{tpu_custom_call.1} parent=11 // pred_region
          _
        $region16: #{tpu_custom_call.1} parent=11 // pred_fallthru
          _
        // Predicated region
        $region17: #{tpu_custom_call.1} parent=11 // pred_check
          %p144 = pneg %p98
        $region18: #{tpu_custom_call.1} parent=11 // pred_check_branch
          %146 = sbr.rel (%p144) target = $region20
        $region19: #{tpu_custom_call.1} parent=11 // pred_region
          _
        $region20: #{tpu_custom_call.1} parent=11 // pred_fallthru
          _
      $region12: #{tpu_custom_call.1} parent=5 // pred_fallthru
        _
      %p147 = scmp.lt.s32.totalorder %s16, 2
      // Predicated region
      $region21: #{tpu_custom_call.1} parent=5 // pred_check
        %p148 = pneg %p147
      $region22: #{tpu_custom_call.1} parent=5 // pred_check_branch
        %150 = sbr.rel (%p148) target = $region24
      $region23: #{tpu_custom_call.1} parent=5 // pred_region
        // Predicated region
        $region25: #{tpu_custom_call.1} parent=23 // pred_check
          %p151 = pneg %p50
        $region26: #{tpu_custom_call.1} parent=23 // pred_check_branch
          %153 = sbr.rel (%p151) target = $region28
        $region27: #{tpu_custom_call.1} parent=23 // pred_region
          %s154 = sand.u32 %s40, 1
          %s155 = scalar_lea.sflag [#allocation4], %s154
          %s156 = sand.u32 %s40, 1
          %s157 = smul.addr %s156, 8
          %s158 = scalar_lea.vmem [#allocation3], %s157
          %s159 = smul.u32 2, %s24
          %161 = vsyncadd %s155, 0
          %s162 = smul.addr %s23, 2
          %s163 = sadd.s32 %s159, %s162
          %s164 = smul.addr %s163, 4
          %s165 = scalar_lea.hbm %s0, %s164
          %s167 = sshll.u32 %s165, 4
          %s168 = int_to_ptr.hbm [resolvable:$true] %s167
          %s169 = sshll.u32 %s158, 4
          %s170 = int_to_ptr.vmem [resolvable:$true] %s169
          %172 = dma.hbm_to_vmem [thread:$0]  %s168, 128, %s170, %s155
        $region28: #{tpu_custom_call.1} parent=23 // pred_fallthru
          _
      $region24: #{tpu_custom_call.1} parent=5 // pred_fallthru
        _
      %p173 = scmp.le.s32.totalorder 1, %s16
      %p174 = scmp.lt.s32.totalorder %s16, 3
      %p175 = pnand %p173, %p174
      %p176 = pneg %p175
      // Predicated region
      $region29: #{tpu_custom_call.1} parent=5 // pred_check
        _
      $region30: #{tpu_custom_call.1} parent=5 // pred_check_branch
        %178 = sbr.rel (%p175) target = $region32
      $region31: #{tpu_custom_call.1} parent=5 // pred_region
        %s179 = ssub.s32 %s16, 1
        %s180 = sand.u32 %s43, 1
        %s181 = scalar_lea.sflag [#allocation4], %s180
        %s182 = sand.u32 %s43, 1
        %s183 = smul.addr %s182, 8
        %s184 = scalar_lea.vmem [#allocation3], %s183
        // Predicated region
        $region33: #{tpu_custom_call.1} parent=31 // pred_check
          %p185 = pneg %p56
        $region34: #{tpu_custom_call.1} parent=31 // pred_check_branch
          %187 = sbr.rel (%p185) target = $region36
        $region35: #{tpu_custom_call.1} parent=31 // pred_region
          %189 = dma.done %s181, 128
        $region36: #{tpu_custom_call.1} parent=31 // pred_fallthru
          _
        %s190 = sand.u32 %s43, 1
        %s191 = scalar_lea.sflag [#allocation4], %s190
        %s192 = sand.u32 %s43, 1
        %s193 = smul.addr %s192, 8
        %s194 = scalar_lea.vmem [#allocation3], %s193
        %p195 = pneg %p56
        %p196 = pneg %p53
        %p197 = pneg %p77
        %p198 = pneg %p74
        %p199 = pneg %p98
        %p200 = pneg %p95
        %p201 = pneg %p126
        %p202 = pneg %p123
        %s203 = sand.u32 %s113, 1
        %s204 = scalar_lea.sflag [#allocation5], %s203
        %s205 = sand.u32 %s113, 1
        %s206 = smul.addr %s205, 8
        %s207 = scalar_lea.vmem [#allocation6], %s206
        %s208 = smul.u32 2, %s26
        %s209 = smul.u32 2, %s26
        %v210 = vld [vmem:[%s184] sm:$0xff]
        %v211 = vld [vmem:[%s1] sm:$0xf]
        %213 = vset.pattern.permute.xlu0 0
        %214 = vperm.xlu0 %213, %v211
        %v215 = vpop.permute.xlu0 %214
        %v217 = vunpack.c.l.s4 839922192
        %v218 = vunpack.c.0.s8 %v217
        %v219 = vperm.slane %v215, %v218
        %v221 = vmul.f32 %v210, %v219
        %223 = vst [vmem:[#allocation1] ss:$2 sm:$0xff] %v221
        %v224 = vld.sshfl [vmem:[#allocation1] sm:$0xff pattern:$0x75316420]
        %v225 = vld.sshfl [vmem:[#allocation1 + $0x8] sm:$0xff pattern:$0x75316420]
        %vm228 = vcmask 1043456
        %v229 = vsel %vm228, %v224, 0.0
        %v230 = vrot.slane %v229, 4
        %v231 = vadd.f32 %v229, %v230
        %v232 = vrot.slane %v231, 2
        %v233 = vadd.f32 %v231, %v232
        %v234 = vrot.slane %v233, 1
        %v235 = vadd.f32 %v233, %v234
        %v236 = vsel %vm228, %v225, 0.0
        %v237 = vrot.slane %v236, 4
        %v238 = vadd.f32 %v236, %v237
        %v239 = vrot.slane %v238, 2
        %v240 = vadd.f32 %v238, %v239
        %v241 = vrot.slane %v240, 1
        %v242 = vadd.f32 %v240, %v241
        %s243 = sld [smem:[#allocation2]]
        %v244 = vstv %s243
        %v245 = vadd.f32 %v235, %v244
        %v246 = vadd.f32 %v242, %v244
        %v247 = vxor.u32 %v245, 2147483648
        %v248 = vxor.u32 %v246, 2147483648
        %v249 = vmul.f32 %v247, 1.442695
        %v250 = vpow.pop %v249
        %v251 = vmul.f32 %v248, 1.442695
        %v252 = vpow.pop %v251
        %v253 = vadd.f32 %v250, 1.0
        %v254 = vadd.f32 %v252, 1.0
        %v255 = vrcp.pop %v253
        %v256 = vmul.f32 %v253, %v255
        %v257 = vsub.f32 1.0, %v256
        %v258 = vmul.f32 %v255, %v257
        %v259 = vadd.f32 %v255, %v258
        %vm260 = vweird.f32 %v253
        %vm261 = vweird.f32 %v255
        %vm262 = vmor %vm260, %vm261
        %v263 = vsel %vm262, %v255, %v259
        %v264 = vand.u32 2147483647, %v253
        %vm265 = vcmp.eq.f32.partialorder %v264, 8.507059e+37
        %v266 = vand.u32 %v253, 2147483648
        %v267 = vor.u32 1.1754944e-38, %v266
        %v268 = vsel %vm265, %v267, %v263
        %v269 = vmul.f32 1.0, %v268
        %v270 = vrcp.pop %v254
        %v271 = vmul.f32 %v254, %v270
        %v272 = vsub.f32 1.0, %v271
        %v273 = vmul.f32 %v270, %v272
        %v274 = vadd.f32 %v270, %v273
        %vm275 = vweird.f32 %v254
        %vm276 = vweird.f32 %v270
        %vm277 = vmor %vm275, %vm276
        %v278 = vsel %vm277, %v270, %v274
        %v279 = vand.u32 2147483647, %v254
        %vm280 = vcmp.eq.f32.partialorder %v279, 8.507059e+37
        %v281 = vand.u32 %v254, 2147483648
        %v282 = vor.u32 1.1754944e-38, %v281
        %v283 = vsel %vm280, %v282, %v278
        %v284 = vmul.f32 1.0, %v283
        %v287 = vrot.slane %v284, 4
        %v288 = vsel %vm228, %v269, %v287
        %v290 = vmul.f32 %v210, %v288
        %291 = vst [vmem:[%s207] sm:$0xff] %v290
        %s292 = sand.u32 %s113, 1
        %s293 = scalar_lea.sflag [#allocation5], %s292
        %s294 = sand.u32 %s113, 1
        %s295 = smul.addr %s294, 8
        %s296 = scalar_lea.vmem [#allocation6], %s295
        // Predicated region
        $region37: #{tpu_custom_call.1} parent=31 // pred_check
          %p297 = pneg %p123
        $region38: #{tpu_custom_call.1} parent=31 // pred_check_branch
          %299 = sbr.rel (%p297) target = $region40
        $region39: #{tpu_custom_call.1} parent=31 // pred_region
          %s300 = smul.u32 2, %s26
          %302 = vsyncadd %s293, 0
          %s303 = smul.addr %s25, 2
          %s304 = sadd.s32 %s300, %s303
          %s305 = smul.addr %s304, 4
          %s306 = scalar_lea.hbm %s3, %s305
          %s308 = sshll.u32 %s296, 4
          %s309 = int_to_ptr.vmem [resolvable:$true] %s308
          %s310 = sshll.u32 %s306, 4
          %s311 = int_to_ptr.hbm [resolvable:$true] %s310
          %313 = dma.vmem_to_hbm [thread:$0]  %s309, 128, %s311, %s293
        $region40: #{tpu_custom_call.1} parent=31 // pred_fallthru
          _
      $region32: #{tpu_custom_call.1} parent=5 // pred_fallthru
        _
      %p314 = scmp.le.s32.totalorder 2, %s16
      // Predicated region
      $region41: #{tpu_custom_call.1} parent=5 // pred_check
        %p315 = pneg %p314
      $region42: #{tpu_custom_call.1} parent=5 // pred_check_branch
        %317 = sbr.rel (%p315) target = $region44
      $region43: #{tpu_custom_call.1} parent=5 // pred_region
        %s318 = ssub.s32 %s16, 2
        // Predicated region
        $region45: #{tpu_custom_call.1} parent=43 // pred_check
          %p319 = pneg %p129
        $region46: #{tpu_custom_call.1} parent=43 // pred_check_branch
          %321 = sbr.rel (%p319) target = $region48
        $region47: #{tpu_custom_call.1} parent=43 // pred_region
          %s322 = sand.u32 %s114, 1
          %s323 = scalar_lea.sflag [#allocation5], %s322
          %s324 = sand.u32 %s114, 1
          %s325 = smul.addr %s324, 8
          %s326 = scalar_lea.vmem [#allocation6], %s325
          %328 = dma.done %s323, 128
        $region48: #{tpu_custom_call.1} parent=43 // pred_fallthru
          _
      $region44: #{tpu_custom_call.1} parent=5 // pred_fallthru
        _
    $region6: #{tpu_custom_call.1} parent=1 // loop_footer
      %s20 = sadd.s32 1, %s16
    $region7: #{tpu_custom_call.1} parent=1 // loop_footer_branch
      %15 = sbr.rel target = $region3
    $region8: #{tpu_custom_call.1} parent=1 // loop_exit
      _
    %329 = vsyncpa [#allocation4], 1
    %s330 = scalar_lea.sflag [#allocation4], 1
    %331 = vsyncpa %s330, 1
    %332 = vsyncpa [#allocation5], 1
    %s333 = scalar_lea.sflag [#allocation5], 1
    %334 = vsyncpa %s333, 1

</llo_original>
